<compile_context>
chip_gen: v6e
topology: v6e:2x2x1
jax: 0.10.0
libtpu: 0.0.40
codegen_flags: <defaults>
</compile_context>

<pallas_src>
import functools

import jax
import jax.numpy as jnp
from jax.experimental import pallas as pl
from jax.experimental.pallas import tpu as pltpu

_MiB = 1024 * 1024


def _tpu_vmem_capacity_bytes():
    """Physical VMEM per TensorCore (128 MiB v5e/v6e, 64 MiB v7x)."""
    try:
        cap = int(getattr(pltpu.get_tpu_info(), "vmem_capacity_bytes", 0) or 0)
        if cap > 0:
            return cap
    except Exception:
        pass
    return 128 * _MiB


# --------------------------------------------------------------------------
# Full-width-V kernel: one pass per row tile, logsumexp over the whole row.
# --------------------------------------------------------------------------
def _ls_ce_kernel_fullv(x_ref, t_ref, out_ref, acc_ref, *,
                        label_smoothing, confidence, n_valid, v_valid,
                        tile_n, tiles_per_group, cast_back):
    g = pl.program_id(0)            # parallel row-group axis (megacore on v7x)
    i = pl.program_id(1)            # sequential row tiles within the group

    @pl.when(i == 0)
    def _():
        acc_ref[...] = jnp.zeros_like(acc_ref)

    x = x_ref[...]                                   # (tile_n, V) native dtype
    in_dtype = x.dtype
    xf = x.astype(jnp.float32)
    tn, vv = xf.shape
    col = jax.lax.broadcasted_iota(jnp.int32, (tn, vv), 1)

    # Row max in the native dtype (exact), everything downstream in fp32.
    m = jnp.max(x, axis=-1, keepdims=True).astype(jnp.float32)       # (tn, 1)
    sum_exp = jnp.sum(jnp.exp(xf - m), axis=-1, keepdims=True)       # (tn, 1)
    lse = jnp.log(sum_exp) + m                                       # (tn, 1)

    tgt = t_ref[...]                                                 # (tn, 1) i32
    onehot = col == tgt

    if cast_back:
        # Exact semantics of F.log_softmax(x, -1, dtype=float32).to(x.dtype).
        logprobs = (xf - lse).astype(in_dtype).astype(jnp.float32)
        nll = -jnp.sum(jnp.where(onehot, logprobs, 0.0), axis=-1, keepdims=True)
        smooth = -jnp.sum(logprobs, axis=-1, keepdims=True) / float(v_valid)
    else:
        # Algebraic form: nll = lse - x_t, smooth = lse - sum(x)/V.
        # Selecting + summing in the native dtype is exact (one nonzero/row).
        x_t = jnp.sum(jnp.where(onehot, x, jnp.zeros_like(x)),
                      axis=-1, keepdims=True).astype(jnp.float32)
        sum_x = jnp.sum(xf, axis=-1, keepdims=True)
        nll = lse - x_t
        smooth = lse - sum_x / float(v_valid)

    loss = confidence * nll + label_smoothing * smooth               # (tn, 1)

    # Mask rows past N (partial last tile / duplicated clamped grid steps).
    # where-select (not multiply) so NaN/Inf garbage in OOB rows is dropped.
    row = jax.lax.broadcasted_iota(jnp.int32, (tn, 1), 0)
    row_global = (g * tiles_per_group + i) * tile_n + row
    loss = jnp.where(row_global < n_valid, loss, 0.0)
    acc_ref[...] += loss

    @pl.when(i == pl.num_programs(1) - 1)
    def _():
        total = jnp.sum(acc_ref[...])                   # one reduce per group
        out_ref[...] = (jnp.zeros_like(out_ref) + total).astype(out_ref.dtype)


# --------------------------------------------------------------------------
# V-tiled kernel: online logsumexp over an inner V grid axis (large vocab).
# --------------------------------------------------------------------------
def _ls_ce_kernel_vtiled(x_ref, t_ref, out_ref,
                         m_sc, l_sc, xt_sc, sx_sc, acc_ref, *,
                         label_smoothing, confidence, n_valid, v_valid,
                         tile_n, tile_v, tiles_per_group):
    g = pl.program_id(0)
    i = pl.program_id(1)
    j = pl.program_id(2)                # reduction over V tiles (innermost)

    @pl.when((i == 0) & (j == 0))
    def _():
        acc_ref[...] = jnp.zeros_like(acc_ref)

    @pl.when(j == 0)
    def _():
        m_sc[...] = jnp.full(m_sc.shape, -jnp.inf, m_sc.dtype)
        l_sc[...] = jnp.zeros_like(l_sc)
        xt_sc[...] = jnp.zeros_like(xt_sc)
        sx_sc[...] = jnp.zeros_like(sx_sc)

    x = x_ref[...]                                   # (tile_n, tile_v) native
    xf = x.astype(jnp.float32)
    tn, tv = xf.shape
    col = j * tile_v + jax.lax.broadcasted_iota(jnp.int32, (tn, tv), 1)

    if v_valid % tile_v != 0:                        # static: last V tile ragged
        lane_valid = col < v_valid
        x_lse = jnp.where(lane_valid, xf, -jnp.inf)  # select, not multiply
        x_sum = jnp.where(lane_valid, xf, 0.0)
    else:
        x_lse = xf
        x_sum = xf

    # Online logsumexp: running fp32 max + rescaled sum of exps.
    m_old = m_sc[...]
    m_new = jnp.maximum(m_old, jnp.max(x_lse, axis=-1, keepdims=True))
    l_sc[...] = l_sc[...] * jnp.exp(m_old - m_new) + jnp.sum(
        jnp.exp(x_lse - m_new), axis=-1, keepdims=True)
    m_sc[...] = m_new

    tgt = t_ref[...]                                                 # (tn, 1)
    onehot = col == tgt
    xt_sc[...] += jnp.sum(jnp.where(onehot, x, jnp.zeros_like(x)),
                          axis=-1, keepdims=True).astype(jnp.float32)
    sx_sc[...] += jnp.sum(x_sum, axis=-1, keepdims=True)

    @pl.when(j == pl.num_programs(2) - 1)
    def _():
        lse = jnp.log(l_sc[...]) + m_sc[...]
        loss = (confidence * (lse - xt_sc[...])
                + label_smoothing * (lse - sx_sc[...] / float(v_valid)))
        row = jax.lax.broadcasted_iota(jnp.int32, (tn, 1), 0)
        row_global = (g * tiles_per_group + i) * tile_n + row
        loss = jnp.where(row_global < n_valid, loss, 0.0)
        acc_ref[...] += loss

    @pl.when((i == pl.num_programs(1) - 1) & (j == pl.num_programs(2) - 1))
    def _():
        total = jnp.sum(acc_ref[...])
        out_ref[...] = (jnp.zeros_like(out_ref) + total).astype(out_ref.dtype)


# --------------------------------------------------------------------------
# Wrapper
# --------------------------------------------------------------------------
def label_smoothing_ce(logits, targets, *, label_smoothing=0.1, loss_fp32=False,
                       tile_n=None, tile_v=None, num_groups=None,
                       vmem_limit_bytes=None):
    """Scalar label-smoothing cross entropy for one (logits, targets) pair."""
    n, v = logits.shape
    confidence = 1.0 - label_smoothing
    cast_back = bool(loss_fp32) and logits.dtype != jnp.float32
    itemsize = jnp.dtype(logits.dtype).itemsize

    # --- generation-aware VMEM sizing (v5e/v6e: 128 MiB, v7x: 64 MiB per TC) ---
    vmem_cap = _tpu_vmem_capacity_bytes()
    if vmem_limit_bytes is None:
        vmem_limit_bytes = max(32 * _MiB,
                               min(vmem_cap - 16 * _MiB, int(vmem_cap * 0.85)))
    # Tile-sizing budget leaves headroom for compiler-internal scratch.
    budget = max(12 * _MiB, int(vmem_limit_bytes) - 24 * _MiB)

    # One row group per TensorCore on the "parallel" axis: 2 on v7x, 1 otherwise.
    if num_groups is None:
        num_groups = 2 if vmem_cap <= 64 * _MiB else 1

    # Path-specific per-row footprint: double-buffered input block + fp32
    # full-tile temporaries (the cast-back path materializes logprobs twice).
    full_row_bytes = v * (2 * itemsize + (24 if cast_back else 16))
    tn_full = max(0, budget // full_row_bytes) // 8 * 8

    # Use the V-tiled (online logsumexp) path when a full-width fp32 row would
    # force tiny row tiles (LLM-scale vocab; most acute on v7x's 64 MiB VMEM).
    use_v_tiling = False
    if not cast_back:
        if tile_v is not None:
            use_v_tiling = v > tile_v
        elif v > 2048 and tn_full < 128:
            use_v_tiling = True
            tile_v = 2048
    # TODO(synk): the loss_fp32 cast-back path still loads full-width rows; a
    # V-tiled variant needs a second pass over V to re-materialize logprobs.

    def _clip_tile_n(t):
        if n < 8:
            return n                      # block row dim == full array dim (legal)
        t = (int(t) // 8) * 8
        return max(8, min(t, (n // 8) * 8, 4096))

    targets2d = targets.astype(jnp.int32).reshape(n, 1)
    cost = pl.CostEstimate(flops=6 * n * v, transcendentals=n * v,
                           bytes_accessed=n * v * itemsize + 4 * n)

    if not use_v_tiling:
        tn = _clip_tile_n(tn_full if tile_n is None else tile_n)
        n_tiles = -(-n // tn)
        groups = max(1, min(int(num_groups), n_tiles))
        tpg = -(-n_tiles // groups)

        def row_map(g, i):
            # Clamp so padded (imbalanced) grid steps re-read the last real
            # tile; their rows are masked in-kernel via the UN-clamped index.
            return (jnp.minimum(g * tpg + i, n_tiles - 1), 0)

        kernel = functools.partial(
            _ls_ce_kernel_fullv,
            label_smoothing=float(label_smoothing), confidence=float(confidence),
            n_valid=n, v_valid=v, tile_n=tn, tiles_per_group=tpg,
            cast_back=cast_back)

        out = pl.pallas_call(
            kernel,
            out_shape=jax.ShapeDtypeStruct((groups, 8, 128), jnp.float32),
            grid_spec=pltpu.PrefetchScalarGridSpec(
                num_scalar_prefetch=0,
                grid=(groups, tpg),
                in_specs=[pl.BlockSpec((tn, v), row_map),
                          pl.BlockSpec((tn, 1), row_map)],
                out_specs=pl.BlockSpec((1, 8, 128), lambda g, i: (g, 0, 0)),
                scratch_shapes=[pltpu.VMEM((tn, 1), jnp.float32)]),
            compiler_params=pltpu.CompilerParams(
                dimension_semantics=("parallel", "arbitrary"),
                vmem_limit_bytes=int(vmem_limit_bytes)),
            cost_estimate=cost,
        )(logits, targets2d)
    else:
        tv = int(min(max(128, (int(tile_v) // 128) * 128), -(-v // 128) * 128))
        v_tiles = -(-v // tv)
        vt_row_bytes = tv * (2 * itemsize + 16) + 64
        tn = _clip_tile_n((budget // vt_row_bytes) // 8 * 8
                          if tile_n is None else tile_n)
        n_tiles = -(-n // tn)
        groups = max(1, min(int(num_groups), n_tiles))
        tpg = -(-n_tiles // groups)

        def x_map(g, i, j):
            return (jnp.minimum(g * tpg + i, n_tiles - 1), j)

        def t_map(g, i, j):
            return (jnp.minimum(g * tpg + i, n_tiles - 1), 0)

        kernel = functools.partial(
            _ls_ce_kernel_vtiled,
            label_smoothing=float(label_smoothing), confidence=float(confidence),
            n_valid=n, v_valid=v, tile_n=tn, tile_v=tv, tiles_per_group=tpg)

        out = pl.pallas_call(
            kernel,
            out_shape=jax.ShapeDtypeStruct((groups, 8, 128), jnp.float32),
            grid_spec=pltpu.PrefetchScalarGridSpec(
                num_scalar_prefetch=0,
                grid=(groups, tpg, v_tiles),
                in_specs=[pl.BlockSpec((tn, tv), x_map),
                          pl.BlockSpec((tn, 1), t_map)],
                out_specs=pl.BlockSpec((1, 8, 128), lambda g, i, j: (g, 0, 0)),
                scratch_shapes=[pltpu.VMEM((tn, 1), jnp.float32)] * 5),
            compiler_params=pltpu.CompilerParams(
                dimension_semantics=("parallel", "arbitrary", "arbitrary"),
                vmem_limit_bytes=int(vmem_limit_bytes)),
            cost_estimate=cost,
        )(logits, targets2d)

    return jnp.sum(out[:, 0, 0]) / float(n)


class LabelSmoothingCrossEntropy:
    """Mirror of the PyTorch module's forward(outputs_dict) glue."""

    def __init__(self, *, label_smoothing, loss_weight, loss_fp32):
        self.label_smoothing = label_smoothing
        self.confidence = 1.0 - label_smoothing
        # Matches the PyTorch module: non-float loss_weight falls back to 1.0.
        self.loss_weight = loss_weight if isinstance(loss_weight, float) else 1.0
        self.loss_fp32 = loss_fp32

    def __call__(self, outputs_dict):
        ret = {}
        for logit, target, loss_identification in zip(
                outputs_dict["logits"], outputs_dict["targets"],
                outputs_dict["loss_names"]):
            loss = label_smoothing_ce(
                logit, target,
                label_smoothing=self.label_smoothing,
                loss_fp32=self.loss_fp32,
            )
            if self.loss_weight != 1.0:
                loss = loss * self.loss_weight
            loss_name = "LabelSmoothing"
            if len(loss_identification) > 0:
                loss_name = loss_name + f" ({loss_identification})"
            ret[loss_name] = loss
        return ret


def _reference(logits, targets, label_smoothing, loss_fp32):
    if loss_fp32 and logits.dtype != jnp.float32:
        logprobs = jax.nn.log_softmax(
            logits.astype(jnp.float32), axis=-1).astype(logits.dtype)
    else:
        logprobs = jax.nn.log_softmax(logits.astype(jnp.float32), axis=-1)
    logprobs = logprobs.astype(jnp.float32)
    nll = -jnp.take_along_axis(
        logprobs, targets[:, None].astype(jnp.int32), axis=-1)[:, 0]
    smooth = -jnp.mean(logprobs, axis=-1)
    loss = (1.0 - label_smoothing) * nll + label_smoothing * smooth
    return jnp.mean(loss)


if __name__ == "__main__":
    key = jax.random.PRNGKey(0)
    k1, k2, k3, k4, k5, k6 = jax.random.split(key, 6)

    # Case 1: aligned shapes, fp32, via the module-forward glue.
    N, V = 16, 256
    logits = jax.random.normal(k1, (N, V), dtype=jnp.float32)
    targets = jax.random.randint(k2, (N,), 0, V, dtype=jnp.int32)
    module = LabelSmoothingCrossEntropy(label_smoothing=0.1, loss_weight=1.0,
                                        loss_fp32=False)
    out = module({"logits": [logits], "targets": [targets],
                  "loss_names": ["demo"]})
    loss = jax.block_until_ready(out["LabelSmoothing (demo)"])
    ref = _reference(logits, targets, 0.1, False)
    assert jnp.allclose(loss, ref, atol=1e-4, rtol=1e-4), (loss, ref)

    # Case 2: ragged N and V — no wrapper-side padding, OOB rows masked in-kernel.
    N2, V2 = 10, 200
    l2 = jax.random.normal(k3, (N2, V2), dtype=jnp.float32)
    t2 = jax.random.randint(k4, (N2,), 0, V2, dtype=jnp.int32)
    loss2 = jax.block_until_ready(label_smoothing_ce(l2, t2, label_smoothing=0.1))
    ref2 = _reference(l2, t2, 0.1, False)
    assert jnp.allclose(loss2, ref2, atol=1e-4, rtol=1e-4), (loss2, ref2)

    # Case 3: bf16 + loss_fp32=True (exact cast-back semantics).
    l3 = logits.astype(jnp.bfloat16)
    loss3 = jax.block_until_ready(
        label_smoothing_ce(l3, targets, label_smoothing=0.1, loss_fp32=True))
    ref3 = _reference(l3, targets, 0.1, True)
    assert jnp.allclose(loss3, ref3, atol=2e-2, rtol=0), (loss3, ref3)

    # Case 4: two row groups ("parallel" axis), odd tile count → duplicated
    # (clamped) grid step masked in-kernel.
    N4, V4 = 24, 256
    l4 = jax.random.normal(k5, (N4, V4), dtype=jnp.float32)
    t4 = jax.random.randint(k6, (N4,), 0, V4, dtype=jnp.int32)
    loss4 = jax.block_until_ready(
        label_smoothing_ce(l4, t4, label_smoothing=0.1, tile_n=8, num_groups=2))
    ref4 = _reference(l4, t4, 0.1, False)
    assert jnp.allclose(loss4, ref4, atol=1e-4, rtol=1e-4), (loss4, ref4)

    # Case 5: V-tiled online-logsumexp path (forced small tile_v); ragged last
    # V tile exercises the in-kernel lane mask.
    N5, V5 = 24, 400
    l5 = jax.random.normal(k5, (N5, V5), dtype=jnp.float32)
    t5 = jax.random.randint(k6, (N5,), 0, V5, dtype=jnp.int32)
    loss5 = jax.block_until_ready(
        label_smoothing_ce(l5, t5, label_smoothing=0.1, tile_n=8, tile_v=128,
                           num_groups=2))
    ref5 = _reference(l5, t5, 0.1, False)
    assert jnp.allclose(loss5, ref5, atol=1e-4, rtol=1e-4), (loss5, ref5)

    print("KERNEL_OK")
</pallas_src>

<mosaic_0001>
module attributes {stable_mosaic.version = 11 : i64} {
  func.func @_ls_ce_kernel_fullv(%arg0: i32, %arg1: i32, %arg2: memref<16x256xf32, #tpu.memory_space<vmem>>, %arg3: memref<16x1xi32, #tpu.memory_space<vmem>>, %arg4: memref<1x8x128xf32, #tpu.memory_space<vmem>>, %arg5: memref<16x1xf32, #tpu.memory_space<vmem>>) attributes {dimension_semantics = [#tpu.dimension_semantics<parallel>, #tpu.dimension_semantics<arbitrary>], iteration_bounds = array<i64: 1, 1>, scalar_prefetch = 0 : i64, scratch_operands = 1 : i64, tpu.core_type = #tpu.core_type<tc>, window_params = [{transform_indices = @transform_0, window_bounds = array<i64: 16, 256>}, {transform_indices = @transform_1, window_bounds = array<i64: 16, 1>}, {transform_indices = @transform_2, window_bounds = array<i64: 1, 8, 128>}]} {
    %c0_i32 = arith.constant 0 : i32
    %0 = arith.cmpi eq, %arg1, %c0_i32 : i32
    %1 = arith.extui %0 : i1 to i32
    %c0_i32_0 = arith.constant 0 : i32
    %2 = arith.cmpi ne, %1, %c0_i32_0 : i32
    scf.if %2 {
      %cst_19 = arith.constant 0.000000e+00 : f32
      %48 = vector.broadcast %cst_19 : f32 to vector<16x1xf32>
      %c0_20 = arith.constant 0 : index
      %c0_21 = arith.constant 0 : index
      %49 = vector.load %arg5[%c0_20, %c0_21] : memref<16x1xf32, #tpu.memory_space<vmem>>, vector<16x1xf32>
      tpu.vector_store %arg5[%c0_20, %c0_21], %48 {strides = array<i32>} : memref<16x1xf32, #tpu.memory_space<vmem>>, vector<16x1xf32>,
    } else {
    }
    %c0 = arith.constant 0 : index
    %c0_1 = arith.constant 0 : index
    %3 = vector.load %arg2[%c0, %c0_1] : memref<16x256xf32, #tpu.memory_space<vmem>>, vector<16x256xf32>
    %4 = tpu.iota {dimensions = array<i32: 1>} : vector<16x256xi32>
    %cst = arith.constant dense<0xFF800000> : vector<16xf32>
    %5 = vector.multi_reduction <maximumf>, %3, %cst [1] : vector<16x256xf32> to vector<16xf32>
    %6 = vector.shape_cast %5 : vector<16xf32> to vector<16x1xf32>
    %7 = vector.broadcast %6 : vector<16x1xf32> to vector<16x256xf32>
    %8 = arith.subf %3, %7 : vector<16x256xf32>
    %9 = math.exp %8 : vector<16x256xf32>
    %cst_2 = arith.constant dense<0.000000e+00> : vector<16xf32>
    %10 = vector.multi_reduction <add>, %9, %cst_2 [1] : vector<16x256xf32> to vector<16xf32>
    %11 = vector.shape_cast %10 : vector<16xf32> to vector<16x1xf32>
    %12 = math.log %11 : vector<16x1xf32>
    %13 = arith.addf %12, %6 : vector<16x1xf32>
    %c0_3 = arith.constant 0 : index
    %c0_4 = arith.constant 0 : index
    %14 = vector.load %arg3[%c0_3, %c0_4] : memref<16x1xi32, #tpu.memory_space<vmem>>, vector<16x1xi32>
    %15 = vector.broadcast %14 : vector<16x1xi32> to vector<16x256xi32>
    %16 = arith.cmpi eq, %4, %15 : vector<16x256xi32>
    %cst_5 = arith.constant 0.000000e+00 : f32
    %17 = vector.broadcast %cst_5 : f32 to vector<16x256xf32>
    %18 = arith.select %16, %3, %17 : vector<16x256xi1>, vector<16x256xf32>
    %cst_6 = arith.constant dense<0.000000e+00> : vector<16xf32>
    %19 = vector.multi_reduction <add>, %18, %cst_6 [1] : vector<16x256xf32> to vector<16xf32>
    %20 = vector.shape_cast %19 : vector<16xf32> to vector<16x1xf32>
    %cst_7 = arith.constant dense<0.000000e+00> : vector<16xf32>
    %21 = vector.multi_reduction <add>, %3, %cst_7 [1] : vector<16x256xf32> to vector<16xf32>
    %22 = vector.shape_cast %21 : vector<16xf32> to vector<16x1xf32>
    %23 = arith.subf %13, %20 : vector<16x1xf32>
    %cst_8 = arith.constant 2.560000e+02 : f32
    %24 = vector.broadcast %cst_8 : f32 to vector<16x1xf32>
    %25 = arith.divf %22, %24 : vector<16x1xf32>
    %26 = arith.subf %13, %25 : vector<16x1xf32>
    %cst_9 = arith.constant 0.899999976 : f32
    %27 = vector.broadcast %cst_9 : f32 to vector<16x1xf32>
    %28 = arith.mulf %27, %23 : vector<16x1xf32>
    %cst_10 = arith.constant 1.000000e-01 : f32
    %29 = vector.broadcast %cst_10 : f32 to vector<16x1xf32>
    %30 = arith.mulf %29, %26 : vector<16x1xf32>
    %31 = arith.addf %28, %30 : vector<16x1xf32>
    %32 = tpu.iota {dimensions = array<i32: 0>} : vector<16x1xi32>
    %c1_i32 = arith.constant 1 : i32
    %33 = arith.muli %arg0, %c1_i32 : i32
    %34 = arith.addi %33, %arg1 : i32
    %c16_i32 = arith.constant 16 : i32
    %35 = arith.muli %34, %c16_i32 : i32
    %36 = vector.broadcast %35 : i32 to vector<16x1xi32>
    %37 = arith.addi %36, %32 : vector<16x1xi32>
    %c16_i32_11 = arith.constant 16 : i32
    %38 = vector.broadcast %c16_i32_11 : i32 to vector<16x1xi32>
    %39 = arith.cmpi slt, %37, %38 : vector<16x1xi32>
    %cst_12 = arith.constant 0.000000e+00 : f32
    %40 = vector.broadcast %cst_12 : f32 to vector<16x1xf32>
    %41 = arith.select %39, %31, %40 : vector<16x1xi1>, vector<16x1xf32>
    %c0_13 = arith.constant 0 : index
    %c0_14 = arith.constant 0 : index
    %42 = vector.load %arg5[%c0_13, %c0_14] : memref<16x1xf32, #tpu.memory_space<vmem>>, vector<16x1xf32>
    %43 = arith.addf %42, %41 : vector<16x1xf32>
    %c0_15 = arith.constant 0 : index
    %c0_16 = arith.constant 0 : index
    %44 = vector.load %arg5[%c0_15, %c0_16] : memref<16x1xf32, #tpu.memory_space<vmem>>, vector<16x1xf32>
    tpu.vector_store %arg5[%c0_15, %c0_16], %43 {strides = array<i32>} : memref<16x1xf32, #tpu.memory_space<vmem>>, vector<16x1xf32>,
    %c0_i32_17 = arith.constant 0 : i32
    %45 = arith.cmpi eq, %arg1, %c0_i32_17 : i32
    %46 = arith.extui %45 : i1 to i32
    %c0_i32_18 = arith.constant 0 : i32
    %47 = arith.cmpi ne, %46, %c0_i32_18 : i32
    scf.if %47 {
      %c0_19 = arith.constant 0 : index
      %c0_20 = arith.constant 0 : index
      %48 = vector.load %arg5[%c0_19, %c0_20] : memref<16x1xf32, #tpu.memory_space<vmem>>, vector<16x1xf32>
      %49 = vector.shape_cast %48 : vector<16x1xf32> to vector<1x16x1xf32>
      %cst_21 = arith.constant dense<0.000000e+00> : vector<1xf32>
      %50 = vector.multi_reduction <add>, %49, %cst_21 [1, 2] : vector<1x16x1xf32> to vector<1xf32>
      %51 = vector.shape_cast %50 : vector<1xf32> to vector<1x1x1xf32>
      %52 = vector.extract %51[0, 0, 0] : f32 from vector<1x1x1xf32>
      %cst_22 = arith.constant 0.000000e+00 : f32
      %53 = vector.broadcast %cst_22 : f32 to vector<1x8x128xf32>
      %54 = vector.broadcast %52 : f32 to vector<1x8x128xf32>
      %55 = arith.addf %53, %54 : vector<1x8x128xf32>
      %c0_23 = arith.constant 0 : index
      %c0_24 = arith.constant 0 : index
      %c0_25 = arith.constant 0 : index
      %56 = vector.load %arg4[%c0_23, %c0_24, %c0_25] : memref<1x8x128xf32, #tpu.memory_space<vmem>>, vector<1x8x128xf32>
      tpu.vector_store %arg4[%c0_23, %c0_24, %c0_25], %55 {strides = array<i32>} : memref<1x8x128xf32, #tpu.memory_space<vmem>>, vector<1x8x128xf32>,
    } else {
    }
    return
  }
  func.func @transform_0(%arg0: i32, %arg1: i32) -> (i32, i32) {
    %c1_i32 = arith.constant 1 : i32
    %0 = arith.muli %arg0, %c1_i32 : i32
    %1 = arith.addi %0, %arg1 : i32
    %c0_i32 = arith.constant 0 : i32
    %2 = arith.minsi %1, %c0_i32 : i32
    %c0_i32_0 = arith.constant 0 : i32
    %c0_i32_1 = arith.constant 0 : i32
    return %2, %c0_i32_0 : i32, i32
  }
  func.func @transform_1(%arg0: i32, %arg1: i32) -> (i32, i32) {
    %c1_i32 = arith.constant 1 : i32
    %0 = arith.muli %arg0, %c1_i32 : i32
    %1 = arith.addi %0, %arg1 : i32
    %c0_i32 = arith.constant 0 : i32
    %2 = arith.minsi %1, %c0_i32 : i32
    %c0_i32_0 = arith.constant 0 : i32
    %c0_i32_1 = arith.constant 0 : i32
    return %2, %c0_i32_0 : i32, i32
  }
  func.func @transform_2(%arg0: i32, %arg1: i32) -> (i32, i32, i32) {
    %c0_i32 = arith.constant 0 : i32
    %c0_i32_0 = arith.constant 0 : i32
    %c0_i32_1 = arith.constant 0 : i32
    return %arg0, %c0_i32, %c0_i32_0 : i32, i32, i32
  }
}

</mosaic_0001>

<llo_original>
// kernel: tpu_custom_call.1
$region0: #{tpu_custom_call.1}
  #allocation0 [shape = 'u32[]', space=smem, size = 0x4, offset = 0x4, fixed_abs, tag = 'smem constant byte address 0x4 - core index']
  #allocation1 [shape = 'u32[144,128]{1,0:T(1,128)}', space=vmem, size = 0x12000, scoped, tag = 'internal scratch']
  #allocation2 [shape = 'f32[16,1]{1,0:T(8,128)}', space=vmem, size = 0x2000, scoped, tag = 'scratch operand']
  %s0 = inlined_call_operand.hbm [shape: f32[16,256], index: 0, kind: input, shape index: {}]
  %s1 = inlined_call_operand.vmem [shape: s32[16,1], index: 1, kind: input, shape index: {}]
  %s2 = inlined_call_operand.hbm [shape: f32[1,8,128], index: 2, kind: output, shape index: {}]
  %s3 = sld [smem:[#allocation0]]
  $region30: #{tpu_custom_call.1} parent=0
    _
  %s5 = ssub.s32 1, %s3
  %s6 = scalar_select 0, %s5, %s3
  $region1: #{tpu_custom_call.1} parent=0
    #allocation3 [shape = 'u8[16384]{0}', space=vmem, size = 0x4000, scoped, tag = 'input window, operand 0, single buffered']
    #allocation4 [shape = 's32[1]{0}', space=sflag, size = 0x4, scoped, tag = 'scoped memory for tpu_custom_call.1']
    #allocation5 [shape = 's32[1]{0}', space=sflag, size = 0x4, scoped, tag = 'scoped memory for tpu_custom_call.1']
    #allocation6 [shape = 'u8[4096]{0}', space=vmem, size = 0x1000, scoped, tag = 'output window, operand 0, single buffered']
    %7 = vsyncpa [#allocation4], 0
    %8 = vsyncpa [#allocation5], 0
    // Predicated region
    $region2: #{tpu_custom_call.1} parent=1 // pred_check
      _
    $region3: #{tpu_custom_call.1} parent=1 // pred_check_branch
      %10 = sbr.rel (0) target = $region5
    $region4: #{tpu_custom_call.1} parent=1 // pred_region
      %s11 = sadd.s32 0, 0
      %p12 = scmp.lt.s32.totalorder %s11, 0
      %s13 = scalar_select %p12, %s11, 0
      %s14 = smul.u32 2, %s13
      %s16 = ssub.s32 512, 512
      %17 = vsyncadd [#allocation4], %s16
      %s18 = smul.addr %s14, 2
      %s19 = smul.addr %s18, 128
      %s20 = scalar_lea.hbm %s0, %s19
      %s21 = sshll.u32 [#allocation3], 4
      %s22 = int_to_ptr.vmem [resolvable:$true] %s21
      %27 = dma.hbm_to_vmem [thread:$0]  %s20, 512, %s22, [#allocation4], 256, 256, 16
    $region5: #{tpu_custom_call.1} parent=1 // pred_fallthru
      _
    // Predicated region
    $region6: #{tpu_custom_call.1} parent=1 // pred_check
      _
    $region7: #{tpu_custom_call.1} parent=1 // pred_check_branch
      %29 = sbr.rel (0) target = $region9
    $region8: #{tpu_custom_call.1} parent=1 // pred_region
      %s30 = sadd.s32 0, 0
      %p31 = scmp.lt.s32.totalorder %s30, 0
      %s32 = scalar_select %p31, %s30, 0
      %s33 = smul.u32 2, %s32
      %p34 = scmp.lt.s32.totalorder %s33, 1
      %s35 = scalar_select %p34, %s33, 1
      %s36 = smul.addr %s35, 8
      %s37 = scalar_lea.vmem %s1, %s36
      %s38 = sadd.s32 0, 0
      %p39 = scmp.lt.s32.totalorder %s38, 0
      %s40 = scalar_select %p39, %s38, 0
      %s41 = smul.u32 2, %s40
    $region9: #{tpu_custom_call.1} parent=1 // pred_fallthru
      _
    // Predicated region
    $region10: #{tpu_custom_call.1} parent=1 // pred_check
      _
    $region11: #{tpu_custom_call.1} parent=1 // pred_check_branch
      %43 = sbr.rel (0) target = $region13
    $region12: #{tpu_custom_call.1} parent=1 // pred_region
      %44 = dma.done [#allocation4], 512
    $region13: #{tpu_custom_call.1} parent=1 // pred_fallthru
      _
    %s45 = sadd.s32 0, 0
    %p46 = scmp.lt.s32.totalorder %s45, 0
    %s47 = scalar_select %p46, %s45, 0
    %s48 = smul.u32 2, %s47
    %p49 = scmp.lt.s32.totalorder %s48, 1
    %s50 = scalar_select %p49, %s48, 1
    %s51 = smul.addr %s50, 8
    %s52 = scalar_lea.vmem %s1, %s51
    %s53 = sadd.s32 0, 0
    %p54 = scmp.lt.s32.totalorder %s53, 0
    %s55 = scalar_select %p54, %s53, 0
    %s56 = smul.u32 2, %s55
    %s57 = sadd.s32 0, 0
    %p58 = scmp.lt.s32.totalorder %s57, 0
    %s59 = scalar_select %p58, %s57, 0
    %s60 = smul.u32 2, %s59
    %p61 = scmp.lt.s32.totalorder %s60, 1
    %s62 = scalar_select %p61, %s60, 1
    %s63 = smul.addr %s62, 8
    %s64 = scalar_lea.vmem %s1, %s63
    %s65 = sadd.s32 0, 0
    %p66 = scmp.lt.s32.totalorder %s65, 0
    %s67 = scalar_select %p66, %s65, 0
    %s68 = smul.u32 2, %s67
    %p69 = scmp.eq.s32.totalorder 0, 0
    // Predicated region
    $region14: #{tpu_custom_call.1} parent=1 // pred_check
      %p70 = pneg %p69
    $region15: #{tpu_custom_call.1} parent=1 // pred_check_branch
      %72 = sbr.rel (%p70) target = $region17
    $region16: #{tpu_custom_call.1} parent=1 // pred_region
      %vm73 = vcmask 7168
      %74 = vst.msk [vmem:[#allocation2] sm:$0xff] %vm73, 0.0
      %75 = vst.msk [vmem:[#allocation2 + $0x8] sm:$0xff] %vm73, 0.0
    $region17: #{tpu_custom_call.1} parent=1 // pred_fallthru
      _
    %v76 = vld [vmem:[#allocation3] sm:$0xff]
    %v77 = vld [vmem:[#allocation3 + $0x8] sm:$0xff]
    %v78 = vld [vmem:[#allocation3 + $0x10] sm:$0xff]
    %v79 = vld [vmem:[#allocation3 + $0x18] sm:$0xff]
    %v80 = vlaneseq
    %v81 = vand.u32 %v80, 127
    %v82 = vadd.s32 %v81, 128
    %v83 = vmax.f32 %v76, %v77
    %84 = vmax.xlane.f32.xlu0 %v83
    %v85 = vpop.xlane.xlu0 %84
    %v86 = vmax.f32 %v78, %v79
    %87 = vmax.xlane.f32.xlu0 %v86
    %v88 = vpop.xlane.xlu0 %87
    %v89 = vsub.f32 %v76, %v85
    %v90 = vsub.f32 %v77, %v85
    %v91 = vsub.f32 %v78, %v88
    %v92 = vsub.f32 %v79, %v88
    %v93 = vmul.f32 %v89, 1.442695
    %v94 = vpow.pop %v93
    %v95 = vmul.f32 %v90, 1.442695
    %v96 = vpow.pop %v95
    %v97 = vmul.f32 %v91, 1.442695
    %v98 = vpow.pop %v97
    %v99 = vmul.f32 %v92, 1.442695
    %v100 = vpow.pop %v99
    %v101 = vadd.f32 %v94, %v96
    %102 = vadd.xlane.f32.xlu0 %v101
    %v103 = vpop.xlane.xlu0 %102
    %v104 = vadd.f32 %v98, %v100
    %105 = vadd.xlane.f32.xlu0 %v104
    %v106 = vpop.xlane.xlu0 %105
    %v107 = vlog2.pop %v103
    %v108 = vmul.f32 %v107, 0.6931472
    %v109 = vlog2.pop %v106
    %v110 = vmul.f32 %v109, 0.6931472
    %v111 = vadd.f32 %v108, %v85
    %v112 = vadd.f32 %v110, %v88
    %v113 = vld [vmem:[%s64] sm:$0xff]
    %v114 = vld [vmem:[%s64 + $0x8] sm:$0xff]
    %115 = vset.pattern.permute.xlu0 0
    %116 = vperm.xlu0 %115, %v113
    %v117 = vpop.permute.xlu0 %116
    %118 = vset.pattern.permute.xlu0 0
    %119 = vperm.xlu0 %118, %v114
    %v120 = vpop.permute.xlu0 %119
    %vm121 = vcmp.eq.s32.totalorder %v81, %v117
    %vm122 = vcmp.eq.s32.totalorder %v82, %v117
    %vm123 = vcmp.eq.s32.totalorder %v81, %v120
    %vm124 = vcmp.eq.s32.totalorder %v82, %v120
    %v125 = vsel %vm121, %v76, 0.0
    %v126 = vsel %vm122, %v77, 0.0
    %v127 = vsel %vm123, %v78, 0.0
    %v128 = vsel %vm124, %v79, 0.0
    %v129 = vadd.f32 %v125, %v126
    %130 = vadd.xlane.f32.xlu0 %v129
    %v131 = vpop.xlane.xlu0 %130
    %v132 = vadd.f32 %v127, %v128
    %133 = vadd.xlane.f32.xlu0 %v132
    %v134 = vpop.xlane.xlu0 %133
    %v135 = vadd.f32 %v76, %v77
    %136 = vadd.xlane.f32.xlu0 %v135
    %v137 = vpop.xlane.xlu0 %136
    %v138 = vadd.f32 %v78, %v79
    %139 = vadd.xlane.f32.xlu0 %v138
    %v140 = vpop.xlane.xlu0 %139
    %v141 = vsub.f32 %v111, %v131
    %v142 = vsub.f32 %v112, %v134
    %v143 = vrcp.pop 256.0
    %v144 = vmul.f32 %v137, %v143
    %v145 = vmul.f32 %v140, %v143
    %v146 = vsub.f32 %v111, %v144
    %v147 = vsub.f32 %v112, %v145
    %v148 = vmul.f32 %v141, 0.9
    %v149 = vmul.f32 %v142, 0.9
    %v150 = vmul.f32 %v146, 0.1
    %v151 = vmul.f32 %v147, 0.1
    %v152 = vadd.f32 %v148, %v150
    %v153 = vadd.f32 %v149, %v151
    %v154 = vlaneseq
    %v155 = vshrl.u32 %v154, 7
    %v156 = vadd.s32 %v155, 8
    %s157 = sadd.s32 0, 0
    %s158 = smul.u32 %s157, 16
    %v159 = vstv %s158
    %v160 = vadd.s32 %v159, %v155
    %v161 = vadd.s32 %v159, %v156
    %vm162 = vcmp.lt.s32.totalorder %v160, 16
    %vm163 = vcmp.lt.s32.totalorder %v161, 16
    %v164 = vsel %vm162, %v152, 0.0
    %v165 = vsel %vm163, %v153, 0.0
    %v166 = vld [vmem:[#allocation2] sm:$0xff]
    %v167 = vld [vmem:[#allocation2 + $0x8] sm:$0xff]
    %v168 = vadd.f32 %v166, %v164
    %v169 = vadd.f32 %v167, %v165
    %vm170 = vcmask 7168
    %171 = vst.msk [vmem:[#allocation2] sm:$0xff] %vm170, %v168
    %172 = vst.msk [vmem:[#allocation2 + $0x8] sm:$0xff] %vm170, %v169
    // Predicated region
    $region18: #{tpu_custom_call.1} parent=1 // pred_check
      %p173 = pneg %p69
    $region19: #{tpu_custom_call.1} parent=1 // pred_check_branch
      %175 = sbr.rel (%p173) target = $region21
    $region20: #{tpu_custom_call.1} parent=1 // pred_region
      %v176 = vld [vmem:[#allocation2] sm:$0xff]
      %v177 = vld [vmem:[#allocation2 + $0x8] sm:$0xff]
      %v178 = vsel %vm170, %v176, 0.0
      %v179 = vsel %vm170, %v177, 0.0
      %v180 = vadd.f32 %v178, %v179
      %181 = vadd.xlane.f32.xlu0 %v180
      %v182 = vpop.xlane.xlu0 %181
      %v183 = vrot.slane %v182, 4
      %v184 = vadd.f32 %v182, %v183
      %v185 = vrot.slane %v184, 2
      %v186 = vadd.f32 %v184, %v185
      %v187 = vrot.slane %v186, 1
      %v188 = vadd.f32 %v186, %v187
      %s189 = vtos %v188
      %v190 = vstv %s189
      %v191 = vadd.f32 %v190, 0.0
      %192 = vst [vmem:[#allocation6] sm:$0xff] %v191
    $region21: #{tpu_custom_call.1} parent=1 // pred_fallthru
      _
    // Predicated region
    $region22: #{tpu_custom_call.1} parent=1 // pred_check
      _
    $region23: #{tpu_custom_call.1} parent=1 // pred_check_branch
      %194 = sbr.rel (0) target = $region25
    $region24: #{tpu_custom_call.1} parent=1 // pred_region
      %s196 = ssub.s32 128, 128
      %197 = vsyncadd [#allocation5], %s196
      %s199 = sshll.u32 [#allocation6], 4
      %s200 = int_to_ptr.vmem [resolvable:$true] %s199
      %202 = dma.vmem_to_hbm [thread:$0]  %s200, 128, %s2, [#allocation5]
    $region25: #{tpu_custom_call.1} parent=1 // pred_fallthru
      _
    // Predicated region
    $region26: #{tpu_custom_call.1} parent=1 // pred_check
      _
    $region27: #{tpu_custom_call.1} parent=1 // pred_check_branch
      %204 = sbr.rel (0) target = $region29
    $region28: #{tpu_custom_call.1} parent=1 // pred_region
      %205 = dma.done [#allocation5], 128
    $region29: #{tpu_custom_call.1} parent=1 // pred_fallthru
      _
    %206 = vsyncpa [#allocation4], 1
    %207 = vsyncpa [#allocation5], 1

</llo_original>
